<compile_context>
chip_gen: v5e
topology: v5e:2x2
jax: 0.10.0
libtpu: 0.0.40
codegen_flags: <defaults>
</compile_context>

<pallas_src>
import jax
import jax.numpy as jnp
from jax.experimental import pallas as pl
from jax.experimental.pallas import tpu as pltpu


def _round_up(v, m):
    return (v + m - 1) // m * m


def _cdiv(a, b):
    return -(-a // b)


def _resident_spec(block_shape, index_map):
    """BlockSpec for a grid-invariant operand: single-buffer it (nothing to pipeline),
    halving its VMEM footprint. Falls back silently if pipeline_mode is unavailable."""
    if hasattr(pl, "Buffered"):
        try:
            return pl.BlockSpec(block_shape, index_map, pipeline_mode=pl.Buffered(1))
        except TypeError:
            pass
    return pl.BlockSpec(block_shape, index_map)


def _linear_kernel(x_ref, w_ref, b_ref, o_ref):
    # x_ref: (TB, I)     native dtype; cast in-kernel (matches torch `.float()`)
    # w_ref: (I, N_pad)  canonical [K, N] MXU rhs layout (pre-transposed once at init)
    # b_ref: (1, N_pad)
    x = x_ref[...].astype(jnp.float32)
    w = w_ref[...].astype(jnp.float32)          # no-op for f32 params; cheap VPU cast otherwise
    acc = jnp.dot(x, w, preferred_element_type=jnp.float32)   # (TB, N_pad) on the MXU
    o_ref[...] = (acc + b_ref[...].astype(jnp.float32)).astype(o_ref.dtype)


def prepare_params(weight, bias):
    """One-time (init-time) parameter prep — NOT a per-forward-call cost.

    weight: [n_classes, i_dim] (nn.Linear layout), bias: [n_classes]
    Returns (w_t, b2d, n_classes):
      w_t: [i_dim, N_pad]  transposed once so the kernel runs the canonical contraction
      b2d: [1, N_pad]
    Class dim is padded to a 128-lane multiple so output stores are unmasked `vst`.
    Dtypes are left as-is; casting happens in-kernel under the DMA/MXU.
    """
    n_classes, i_dim = weight.shape
    n_pad = _round_up(n_classes, 128)
    w_t = jnp.transpose(weight)                 # [i_dim, n_classes]
    b = bias
    if n_pad != n_classes:
        w_t = jnp.pad(w_t, ((0, 0), (0, n_pad - n_classes)))
        b = jnp.pad(b, ((0, n_pad - n_classes),))
    return w_t, b.reshape(1, n_pad), n_classes


def dummy_model_forward(features, w_t, b2d, n_classes):
    """Pallas equivalent of DummyModel.forward: {'probs': squeeze(x.float() @ W^T + b)}."""
    B, I = features.shape
    I_w, N_pad = w_t.shape
    assert I_w == I, (I_w, I)

    # Batch tile: sublane-aligned (multiple of 8). Tiny batches -> one block / one
    # grid step; larger batches -> >=2 tiles (feeds both v7x TensorCores), capped at
    # 512 rows (~85% of HBM roofline for streaming tiles).
    B8 = _round_up(B, 8)
    if B8 <= 64:
        TB = B8
    else:
        TB = min(512, _round_up(_cdiv(B8, 2), 8))
    grid_b = _cdiv(B, TB)   # partial last tile OK: OOB reads are dead rows, writes masked

    # VMEM budget: resident W (counted twice in case single-buffering is unavailable)
    # + bias + double-buffered x / out tiles, with headroom.
    itemsize = lambda a: jnp.dtype(a.dtype).itemsize
    budget = (2 * I * N_pad * itemsize(w_t)
              + 2 * N_pad * itemsize(b2d)
              + 2 * TB * I * itemsize(features)
              + 2 * TB * N_pad * 4)
    vmem_limit = int(min(max(budget * 5 // 4 + (1 << 20), 4 << 20), 64 << 20))
    # TODO(synk): for very large i_dim (resident W slab > ~16-24 MiB, especially on
    # v7x's 64 MiB VMEM) add a K grid axis marked "arbitrary" with an f32 accumulator.

    out = pl.pallas_call(
        _linear_kernel,
        out_shape=jax.ShapeDtypeStruct((B, N_pad), jnp.float32),
        grid_spec=pltpu.PrefetchScalarGridSpec(
            num_scalar_prefetch=0,
            grid=(grid_b,),
            in_specs=[
                pl.BlockSpec((TB, I), lambda i: (i, 0)),        # x streams over batch
                _resident_spec((I, N_pad), lambda i: (0, 0)),   # W resident, single-buffered
                _resident_spec((1, N_pad), lambda i: (0, 0)),   # bias resident
            ],
            out_specs=pl.BlockSpec((TB, N_pad), lambda i: (i, 0)),
        ),
        compiler_params=pltpu.CompilerParams(
            # Batch tiles are independent -> shard across TensorCores on v7x.
            dimension_semantics=("parallel",),
            vmem_limit_bytes=vmem_limit,
        ),
    )(features, w_t, b2d)

    logits = out[:, :n_classes]

    # TODO(synk): nn.Dropout is instantiated in __init__ but never applied in forward,
    # so no dropout is performed here either.
    # Matches torch `.squeeze()` with no dim argument: drops ALL unit axes.
    return {"probs": jnp.squeeze(logits)}


if __name__ == "__main__":
    key = jax.random.PRNGKey(0)
    k_x, k_w, k_b = jax.random.split(key, 3)

    batch, i_dim, n_classes = 8, 32, 8

    # Deterministic synthetic parameters (not loaded from a checkpoint).
    weight = jax.random.normal(k_w, (n_classes, i_dim), dtype=jnp.float32) * 0.02
    bias = jax.random.normal(k_b, (n_classes,), dtype=jnp.float32) * 0.01

    # Input dict mirroring the PyTorch module's `input['features']`.
    features = jax.random.normal(k_x, (batch, i_dim), dtype=jnp.float32)
    inputs = {"features": features}

    # One-time parameter prep (init-time cost), then the forward pass.
    w_t, b2d, n_out = prepare_params(weight, bias)
    out = dummy_model_forward(inputs["features"], w_t, b2d, n_out)
    probs = jax.block_until_ready(out["probs"])

    # Reference check in plain JAX.
    ref = jnp.squeeze(features.astype(jnp.float32) @ weight.T + bias)
    assert probs.shape == ref.shape, (probs.shape, ref.shape)
    assert jnp.allclose(probs, ref, atol=1e-5, rtol=1e-5)

    print("KERNEL_OK")
</pallas_src>

<mosaic_0001>
module attributes {stable_mosaic.version = 11 : i64} {
  func.func @_linear_kernel(%arg0: i32, %arg1: memref<8x32xf32, #tpu.memory_space<vmem>>, %arg2: memref<32x128xf32, #tpu.memory_space<vmem>>, %arg3: memref<1x128xf32, #tpu.memory_space<vmem>>, %arg4: memref<8x128xf32, #tpu.memory_space<vmem>>) attributes {dimension_semantics = [#tpu.dimension_semantics<parallel>], iteration_bounds = array<i64: 1>, scalar_prefetch = 0 : i64, scratch_operands = 0 : i64, tpu.core_type = #tpu.core_type<tc>, window_params = [{transform_indices = @transform_0, window_bounds = array<i64: 8, 32>}, {pipeline_mode = #tpu.pipeline_mode<synchronous>, transform_indices = @transform_1, window_bounds = array<i64: 32, 128>}, {pipeline_mode = #tpu.pipeline_mode<synchronous>, transform_indices = @transform_2, window_bounds = array<i64: 1, 128>}, {transform_indices = @transform_3, window_bounds = array<i64: 8, 128>}]} {
    %c0 = arith.constant 0 : index
    %c0_0 = arith.constant 0 : index
    %0 = vector.load %arg1[%c0, %c0_0] : memref<8x32xf32, #tpu.memory_space<vmem>>, vector<8x32xf32>
    %c0_1 = arith.constant 0 : index
    %c0_2 = arith.constant 0 : index
    %1 = vector.load %arg2[%c0_1, %c0_2] : memref<32x128xf32, #tpu.memory_space<vmem>>, vector<32x128xf32>
    %cst = arith.constant dense<0.000000e+00> : vector<8x128xf32>
    %2 = tpu.matmul %0, %1, %cst {dimension_numbers = #tpu.dot_dimension_numbers<[1], [0], [0], [1], [0, 0, 1, 1], [], []>} : vector<8x32xf32>, vector<32x128xf32>, vector<8x128xf32> -> vector<8x128xf32>
    %c0_3 = arith.constant 0 : index
    %c0_4 = arith.constant 0 : index
    %3 = vector.load %arg3[%c0_3, %c0_4] : memref<1x128xf32, #tpu.memory_space<vmem>>, vector<1x128xf32>
    %4 = vector.broadcast %3 : vector<1x128xf32> to vector<8x128xf32>
    %5 = arith.addf %2, %4 : vector<8x128xf32>
    %c0_5 = arith.constant 0 : index
    %c0_6 = arith.constant 0 : index
    %6 = vector.load %arg4[%c0_5, %c0_6] : memref<8x128xf32, #tpu.memory_space<vmem>>, vector<8x128xf32>
    tpu.vector_store %arg4[%c0_5, %c0_6], %5 {strides = array<i32>} : memref<8x128xf32, #tpu.memory_space<vmem>>, vector<8x128xf32>,
    return
  }
  func.func @transform_0(%arg0: i32) -> (i32, i32) {
    %c0_i32 = arith.constant 0 : i32
    %c0_i32_0 = arith.constant 0 : i32
    return %arg0, %c0_i32 : i32, i32
  }
  func.func @transform_1(%arg0: i32) -> (i32, i32) {
    %c0_i32 = arith.constant 0 : i32
    %c0_i32_0 = arith.constant 0 : i32
    %c0_i32_1 = arith.constant 0 : i32
    return %c0_i32, %c0_i32_0 : i32, i32
  }
  func.func @transform_2(%arg0: i32) -> (i32, i32) {
    %c0_i32 = arith.constant 0 : i32
    %c0_i32_0 = arith.constant 0 : i32
    %c0_i32_1 = arith.constant 0 : i32
    return %c0_i32, %c0_i32_0 : i32, i32
  }
  func.func @transform_3(%arg0: i32) -> (i32, i32) {
    %c0_i32 = arith.constant 0 : i32
    %c0_i32_0 = arith.constant 0 : i32
    return %arg0, %c0_i32 : i32, i32
  }
}

</mosaic_0001>

<llo_original>
// kernel: tpu_custom_call.1
$region0: #{tpu_custom_call.1}
  #allocation0 [shape = 'u32[]', space=smem, size = 0x4, offset = 0x4, fixed_abs, tag = 'smem constant byte address 0x4 - core index']
  #allocation1 [shape = 'u32[72,128]{1,0:T(1,128)}', space=vmem, size = 0x9000, scoped, tag = 'internal scratch']
  %s0 = inlined_call_operand.hbm [shape: f32[8,32], index: 0, kind: input, shape index: {}]
  %s1 = inlined_call_operand.hbm [shape: f32[32,128], index: 1, kind: input, shape index: {}]
  %s2 = inlined_call_operand.vmem [shape: f32[1,128], index: 2, kind: input, shape index: {}]
  %s3 = inlined_call_operand.hbm [shape: f32[8,128], index: 3, kind: output, shape index: {}]
  %s4 = sld [smem:[#allocation0]]
  $region30: #{tpu_custom_call.1} parent=0
    _
  %s6 = ssub.s32 1, %s4
  %s7 = scalar_select 0, %s6, %s4
  $region1: #{tpu_custom_call.1} parent=0
    #allocation2 [shape = 'u8[4096]{0}', space=vmem, size = 0x1000, scoped, tag = 'input window, operand 0, single buffered']
    #allocation3 [shape = 's32[1]{0}', space=sflag, size = 0x4, scoped, tag = 'scoped memory for tpu_custom_call.1']
    #allocation4 [shape = 's32[1]{0}', space=sflag, size = 0x4, scoped, tag = 'scoped memory for tpu_custom_call.1']
    #allocation5 [shape = 'u8[16384]{0}', space=vmem, size = 0x4000, scoped, tag = 'input window, operand 1, single buffered']
    #allocation6 [shape = 's32[1]{0}', space=sflag, size = 0x4, scoped, tag = 'scoped memory for tpu_custom_call.1']
    #allocation7 [shape = 'u8[4096]{0}', space=vmem, size = 0x1000, scoped, tag = 'output window, operand 0, single buffered']
    %8 = vsyncpa [#allocation3], 0
    %9 = vsyncpa [#allocation6], 0
    %10 = vsyncpa [#allocation4], 0
    // Predicated region
    $region2: #{tpu_custom_call.1} parent=1 // pred_check
      _
    $region3: #{tpu_custom_call.1} parent=1 // pred_check_branch
      %12 = sbr.rel (0) target = $region5
    $region4: #{tpu_custom_call.1} parent=1 // pred_region
      %14 = vsyncadd [#allocation3], 0
      %s16 = sshll.u32 %s0, 4
      %s17 = int_to_ptr.hbm [resolvable:$true] %s16
      %s18 = sshll.u32 [#allocation2], 4
      %s19 = int_to_ptr.vmem [resolvable:$true] %s18
      %21 = dma.hbm_to_vmem [thread:$0]  %s17, 128, %s19, [#allocation3]
    $region5: #{tpu_custom_call.1} parent=1 // pred_fallthru
      _
    // Predicated region
    $region6: #{tpu_custom_call.1} parent=1 // pred_check
      _
    $region7: #{tpu_custom_call.1} parent=1 // pred_check_branch
      %23 = sbr.rel (0) target = $region9
    $region8: #{tpu_custom_call.1} parent=1 // pred_region
      %25 = vsyncadd [#allocation6], 0
      %s26 = sshll.u32 %s1, 4
      %s27 = int_to_ptr.hbm [resolvable:$true] %s26
      %s28 = sshll.u32 [#allocation5], 4
      %s29 = int_to_ptr.vmem [resolvable:$true] %s28
      %34 = dma.hbm_to_vmem [thread:$0]  %s27, 512, %s29, [#allocation6], 128, 128, 8
    $region9: #{tpu_custom_call.1} parent=1 // pred_fallthru
      _
    // Predicated region
    $region10: #{tpu_custom_call.1} parent=1 // pred_check
      _
    $region11: #{tpu_custom_call.1} parent=1 // pred_check_branch
      %36 = sbr.rel (0) target = $region13
    $region12: #{tpu_custom_call.1} parent=1 // pred_region
      _
    $region13: #{tpu_custom_call.1} parent=1 // pred_fallthru
      _
    // Predicated region
    $region14: #{tpu_custom_call.1} parent=1 // pred_check
      _
    $region15: #{tpu_custom_call.1} parent=1 // pred_check_branch
      %38 = sbr.rel (0) target = $region17
    $region16: #{tpu_custom_call.1} parent=1 // pred_region
      %40 = dma.done [#allocation3], 128
    $region17: #{tpu_custom_call.1} parent=1 // pred_fallthru
      _
    // Predicated region
    $region18: #{tpu_custom_call.1} parent=1 // pred_check
      _
    $region19: #{tpu_custom_call.1} parent=1 // pred_check_branch
      %42 = sbr.rel (0) target = $region21
    $region20: #{tpu_custom_call.1} parent=1 // pred_region
      %44 = dma.done [#allocation6], 512
    $region21: #{tpu_custom_call.1} parent=1 // pred_fallthru
      _
    %v45 = vld [vmem:[#allocation2] sm:$0xff]
    %v46 = vld [vmem:[#allocation5] sm:$0xff]
    %v47 = vld [vmem:[#allocation5 + $0x8] sm:$0xff]
    %v48 = vld [vmem:[#allocation5 + $0x10] sm:$0xff]
    %v49 = vld [vmem:[#allocation5 + $0x18] sm:$0xff]
    %v50 = vld [vmem:[%s2] sm:$0x1]
    %v52 = vperm.slane %v50, 0
    %vm54 = vcmask 261120
    %v56 = vsel %vm54, %v45, 0
    %58 = vmatpush.msra.mxu0 0.0
    %59 = vmatpush.msra.mxu0 0.0
    %60 = vmatpush.msra.mxu0 0.0
    %61 = vmatpush.msra.mxu0 0.0
    %62 = vmatpush.msra.mxu0 0.0
    %63 = vmatpush.msra.mxu0 0.0
    %64 = vmatpush.msra.mxu0 0.0
    %65 = vmatpush.msra.mxu0 0.0
    %66 = vmatpush.msra.mxu0 0.0
    %67 = vmatpush.msra.mxu0 0.0
    %68 = vmatpush.msra.mxu0 0.0
    %69 = vmatpush.msra.mxu0 0.0
    %70 = vmatpush.msra.mxu0 %v49
    %71 = vmatpush.msra.mxu0 %v48
    %72 = vmatpush.msra.mxu0 %v47
    %73 = vmatpush.msra.mxu0 %v46
    %74 = vmatmul.f32.gmra.mxu0 %v56
    %v75 = vpop.f32.mrf.mxu0
    %v76 = vadd.f32 %v52, %v75
    %77 = vdwg.mxu0
    %78 = vst [vmem:[#allocation7] sm:$0xff] %v76
    // Predicated region
    $region22: #{tpu_custom_call.1} parent=1 // pred_check
      _
    $region23: #{tpu_custom_call.1} parent=1 // pred_check_branch
      %80 = sbr.rel (0) target = $region25
    $region24: #{tpu_custom_call.1} parent=1 // pred_region
      %82 = vsyncadd [#allocation4], 0
      %s84 = sshll.u32 [#allocation7], 4
      %s85 = int_to_ptr.vmem [resolvable:$true] %s84
      %s86 = sshll.u32 %s3, 4
      %s87 = int_to_ptr.hbm [resolvable:$true] %s86
      %89 = dma.vmem_to_hbm [thread:$0]  %s85, 128, %s87, [#allocation4]
    $region25: #{tpu_custom_call.1} parent=1 // pred_fallthru
      _
    // Predicated region
    $region26: #{tpu_custom_call.1} parent=1 // pred_check
      _
    $region27: #{tpu_custom_call.1} parent=1 // pred_check_branch
      %91 = sbr.rel (0) target = $region29
    $region28: #{tpu_custom_call.1} parent=1 // pred_region
      %93 = dma.done [#allocation4], 128
    $region29: #{tpu_custom_call.1} parent=1 // pred_fallthru
      _
    %94 = vsyncpa [#allocation3], 1
    %95 = vsyncpa [#allocation6], 1
    %96 = vsyncpa [#allocation4], 1

</llo_original>
